<compile_context>
chip_gen: v5e
topology: v5e:2x2
jax: 0.10.0
libtpu: 0.0.40
codegen_flags: <defaults>
</compile_context>

<pallas_src>
import functools

import jax
import jax.numpy as jnp
from jax.experimental import pallas as pl
from jax.experimental.pallas import tpu as pltpu


# Set to jax.lax.Precision.HIGHEST for exact f32 parity with the PyTorch fc.
# Default precision is kept here (review: "accept the drift"); the fc is a
# one-shot epilogue so this is a pure accuracy/compat knob, not a perf one.
FC_PRECISION = None


def _round_up(x, m):
    return ((x + m - 1) // m) * m


def _cdiv(a, b):
    return (a + b - 1) // b


def _vmem_limits():
    """Returns (physical VMEM per core, scoped limit to request)."""
    cap = 64 * 1024 * 1024                     # conservative fallback (v7x per-TC VMEM)
    try:
        info = pltpu.get_tpu_info()
        cap = int(getattr(info, "vmem_capacity_bytes", cap)) or cap
    except Exception:
        pass
    # v5e/v6e (128 MiB physical): ~96 MiB scoped; v7x (64 MiB): ~48 MiB scoped.
    return cap, min(100 * 1024 * 1024, (cap * 3) // 4)


def fintune_kernel(emb_ref, w_ref, b_ref, labels_ref,
                   logits_ref, loss_ref, pooled_acc,
                   *, num_labels, true_t, tile_t, chunk, needs_mask):
    # emb_ref:    (TB, TT, D2)  bf16/f32 VMEM   (streamed tile; last T/B tile ragged)
    # w_ref:      (D2, LP)      f32      VMEM   (resident)
    # b_ref:      (1,  LP)      f32      VMEM   (resident)
    # labels_ref: (TB, 1)       i32      VMEM
    # logits_ref: (TB, LP)      f32      VMEM   (output, lane-dense slab)
    # loss_ref:   (TB, 1)       f32      VMEM   (output, per-row CE loss)
    # pooled_acc: (TB, D2)      f32      VMEM   scratch accumulator
    t = pl.program_id(1)

    @pl.when(t == 0)
    def _init():
        pooled_acc[...] = jnp.zeros_like(pooled_acc)

    n_chunks = tile_t // chunk
    tile_base = t * tile_t

    def _accum(start):
        # Chunked cast keeps the f32 temp to ~2 MiB instead of a full-tile copy.
        x = emb_ref[:, pl.ds(start, chunk), :].astype(jnp.float32)   # (TB, chunk, D2)
        if needs_mask:
            row = tile_base + start + jax.lax.broadcasted_iota(jnp.int32, x.shape, 1)
            x = jnp.where(row < true_t, x, 0.0)
        pooled_acc[...] += jnp.sum(x, axis=1)

    if n_chunks == 1:
        _accum(0)
    else:
        def _body(c, carry):
            _accum(pl.multiple_of(c * chunk, 8))
            return carry
        jax.lax.fori_loop(0, n_chunks, _body, 0)

    @pl.when(t == pl.num_programs(1) - 1)
    def _finalize():
        pooled = pooled_acc[...]                                           # (TB, D2)
        logits = jnp.dot(pooled, w_ref[...],
                         preferred_element_type=jnp.float32,
                         precision=FC_PRECISION) + b_ref[...]              # (TB, LP)
        logits_ref[...] = logits

        # Cross entropy per row; padded classifier columns masked out.
        col = jax.lax.broadcasted_iota(jnp.int32, logits.shape, 1)         # (TB, LP)
        masked = jnp.where(col < num_labels, logits, jnp.float32(-1e30))
        m = jnp.max(masked, axis=-1, keepdims=True)                        # (TB, 1)
        lse = m + jnp.log(jnp.sum(jnp.exp(masked - m), axis=-1, keepdims=True))

        labels = labels_ref[...]                                           # (TB, 1)
        onehot = (col == labels).astype(jnp.float32)
        target_logit = jnp.sum(masked * onehot, axis=-1, keepdims=True)    # (TB, 1)
        loss_ref[...] = lse - target_logit


def fintune_forward(embeddings, fc_w, fc_b, labels, *, tile_t=None, chunk_t=None):
    """embeddings: (B, T, D2) bf16/f32, fc_w: (D2, L), fc_b: (L,)/(1,L), labels: (B,) int."""
    B, T, D2 = embeddings.shape
    L = fc_w.shape[-1]
    fc_b = jnp.reshape(fc_b, (1, L))
    itemsize = jnp.dtype(embeddings.dtype).itemsize

    # --- batch tile: fill MXU rows for big B, keep >= 2 parallel grid steps ---
    TB = 8
    for cand in (128, 64, 32, 16):
        if B >= 2 * cand and B % cand == 0:
            TB = cand
            break
    B_pad = _round_up(B, TB)
    nb = B_pad // TB

    LP = _round_up(max(L, 128), 128)           # lane-dense classifier width

    # --- T tiling derived from this generation's scoped-VMEM budget -----------
    _, vmem_limit = _vmem_limits()
    resident = 4 * (2 * D2 * LP + 2 * LP + TB * D2)        # W, b (x2 buffers) + pooled_acc
    resident += 2 * 4 * (TB * LP + TB) + 2 * 4 * TB * 128  # outputs + labels block
    emb_budget = max(4 << 20, vmem_limit - resident - (8 << 20))

    # chunk = T rows reduced per inner step (bounds the in-kernel f32 temp ~2 MiB)
    if chunk_t is None:
        chunk = max(8, ((2 << 20) // (TB * D2 * 4)) // 8 * 8)
    else:
        chunk = max(8, (chunk_t // 8) * 8)

    if T <= chunk:
        TT, chunk, nt = T, T, 1                # whole T in one tile / one chunk
    else:
        fit_rows = (emb_budget // (2 * TB * D2 * itemsize)) if tile_t is None else tile_t
        k = max(1, min(fit_rows // chunk, T // chunk))
        TT = k * chunk
        nt = _cdiv(T, TT)
    needs_mask = (T % TT) != 0                 # ragged final T tile -> mask in kernel

    # --- only the rare ragged-batch case pays a (tiny) pad; T is never padded --
    if B_pad != B:
        embeddings = jnp.pad(embeddings, ((0, B_pad - B), (0, 0), (0, 0)))
        labels_in = jnp.pad(labels.astype(jnp.int32), (0, B_pad - B))
    else:
        labels_in = labels.astype(jnp.int32)
    labels_2d = labels_in.reshape(B_pad, 1)

    w_p = jnp.pad(fc_w.astype(jnp.float32), ((0, 0), (0, LP - L)))
    b_p = jnp.pad(fc_b.astype(jnp.float32), ((0, 0), (0, LP - L)))

    cost = pl.CostEstimate(
        flops=int(B_pad * T * D2 + 2 * B_pad * D2 * LP),
        transcendentals=int(B_pad * LP),
        bytes_accessed=int(B_pad * T * D2 * itemsize + D2 * LP * 4
                           + B_pad * (LP + 1) * 4 + B_pad * 4),
    )

    logits, per_row_loss = pl.pallas_call(
        functools.partial(fintune_kernel, num_labels=L, true_t=T,
                          tile_t=TT, chunk=chunk, needs_mask=needs_mask),
        grid=(nb, nt),
        in_specs=[
            pl.BlockSpec((TB, TT, D2), lambda b, t: (b, t, 0)),   # embeddings tile
            pl.BlockSpec((D2, LP), lambda b, t: (0, 0)),          # fc weight (resident)
            pl.BlockSpec((1, LP), lambda b, t: (0, 0)),           # fc bias (resident)
            pl.BlockSpec((TB, 1), lambda b, t: (b, 0)),           # labels tile
        ],
        out_specs=(
            pl.BlockSpec((TB, LP), lambda b, t: (b, 0)),          # lane-dense logits slab
            pl.BlockSpec((TB, 1), lambda b, t: (b, 0)),           # per-row CE loss
        ),
        out_shape=(
            jax.ShapeDtypeStruct((B_pad, LP), jnp.float32),
            jax.ShapeDtypeStruct((B_pad, 1), jnp.float32),
        ),
        scratch_shapes=[pltpu.VMEM((TB, D2), jnp.float32)],
        compiler_params=pltpu.CompilerParams(
            dimension_semantics=("parallel", "arbitrary"),
            vmem_limit_bytes=int(vmem_limit)),
        cost_estimate=cost,
    )(embeddings, w_p, b_p, labels_2d)

    logits = logits[:B, :L]
    per_row = per_row_loss[:B, 0]
    # nn.CrossEntropyLoss defaults: mean over non-ignored rows (ignore_index=-100).
    valid = (labels != -100).astype(jnp.float32)
    denom = jnp.maximum(jnp.sum(valid), 1.0)
    loss = jnp.sum(per_row * valid) / denom

    return {"loss": loss, "predictions": logits, "label_ids": labels}


def _reference(embeddings, fc_w, fc_b, labels):
    emb = embeddings.astype(jnp.float32)
    pooled = jnp.sum(emb, axis=1)
    logits = jnp.dot(pooled, fc_w.astype(jnp.float32),
                     precision=jax.lax.Precision.HIGHEST) + fc_b.reshape(1, -1).astype(jnp.float32)
    lse = jax.scipy.special.logsumexp(logits, axis=-1)
    tgt = jnp.take_along_axis(logits, labels[:, None], axis=-1)[:, 0]
    return jnp.mean(lse - tgt), logits


if __name__ == "__main__":
    key = jax.random.PRNGKey(0)

    # --- Test 1: shapes consistent with the module defaults -------------------
    # target_length=3 -> T=3; fc input = 2*dim; num_labels=2; small batch.
    B, T, dim, L = 2, 3, 32, 2
    D2 = 2 * dim
    k_emb, k_w, k_b, k_lab, key = jax.random.split(key, 5)
    embeddings = jax.random.normal(k_emb, (B, T, D2), jnp.float32).astype(jnp.bfloat16)
    fc_w = jax.random.normal(k_w, (D2, L), jnp.float32) / jnp.sqrt(D2)
    fc_b = jax.random.normal(k_b, (1, L), jnp.float32) * 0.01
    labels = jax.random.randint(k_lab, (B,), 0, L, jnp.int32)

    out = fintune_forward(embeddings, fc_w, fc_b, labels)
    jax.block_until_ready(out)
    ref_loss, ref_logits = _reference(embeddings, fc_w, fc_b, labels)
    assert jnp.allclose(out["predictions"], ref_logits, atol=1e-2, rtol=1e-2), (
        out["predictions"], ref_logits)
    assert jnp.allclose(out["loss"], ref_loss, atol=1e-2, rtol=1e-2), (
        out["loss"], ref_loss)

    # --- Test 2: exercise the streaming path (multi-tile T, ragged final tile,
    # chunked in-kernel accumulation).  Values are exactly representable in bf16
    # so the check is independent of MXU input precision. ----------------------
    B2, T2, D22, L2 = 4, 50, 128, 3
    k1, k2, k3, k4, key = jax.random.split(key, 5)
    emb2 = jax.random.randint(k1, (B2, T2, D22), -3, 4).astype(jnp.bfloat16)
    w2 = jax.random.randint(k2, (D22, L2), -8, 9).astype(jnp.float32) / 16.0
    b2 = jax.random.randint(k3, (1, L2), -4, 5).astype(jnp.float32) / 8.0
    lab2 = jax.random.randint(k4, (B2,), 0, L2, jnp.int32)

    out2 = fintune_forward(emb2, w2, b2, lab2, tile_t=16, chunk_t=8)
    jax.block_until_ready(out2)
    ref_loss2, ref_logits2 = _reference(emb2, w2, b2, lab2)
    assert jnp.allclose(out2["predictions"], ref_logits2, atol=1e-2, rtol=1e-2), (
        out2["predictions"], ref_logits2)
    assert jnp.allclose(out2["loss"], ref_loss2, atol=1e-2, rtol=1e-2), (
        out2["loss"], ref_loss2)

    print("KERNEL_OK")
</pallas_src>

<mosaic_0001>
module attributes {stable_mosaic.version = 11 : i64} {
  func.func @fintune_kernel(%arg0: i32, %arg1: i32, %arg2: memref<8x3x64xbf16, #tpu.memory_space<vmem>>, %arg3: memref<64x128xf32, #tpu.memory_space<vmem>>, %arg4: memref<1x128xf32, #tpu.memory_space<vmem>>, %arg5: memref<8x1xi32, #tpu.memory_space<vmem>>, %arg6: memref<8x128xf32, #tpu.memory_space<vmem>>, %arg7: memref<8x1xf32, #tpu.memory_space<vmem>>, %arg8: memref<8x64xf32, #tpu.memory_space<vmem>>) attributes {dimension_semantics = [#tpu.dimension_semantics<parallel>, #tpu.dimension_semantics<arbitrary>], iteration_bounds = array<i64: 1, 1>, scalar_prefetch = 0 : i64, scratch_operands = 1 : i64, tpu.core_type = #tpu.core_type<tc>, window_params = [{transform_indices = @transform_0, window_bounds = array<i64: 8, 3, 64>}, {pipeline_mode = #tpu.pipeline_mode<synchronous>, transform_indices = @transform_1, window_bounds = array<i64: 64, 128>}, {pipeline_mode = #tpu.pipeline_mode<synchronous>, transform_indices = @transform_2, window_bounds = array<i64: 1, 128>}, {transform_indices = @transform_3, window_bounds = array<i64: 8, 1>}, {transform_indices = @transform_4, window_bounds = array<i64: 8, 128>}, {transform_indices = @transform_5, window_bounds = array<i64: 8, 1>}]} {
    %c0_i32 = arith.constant 0 : i32
    %0 = arith.cmpi eq, %arg1, %c0_i32 : i32
    %1 = arith.extui %0 : i1 to i32
    %c0_i32_0 = arith.constant 0 : i32
    %2 = arith.cmpi ne, %1, %c0_i32_0 : i32
    scf.if %2 {
      %cst_9 = arith.constant 0.000000e+00 : f32
      %12 = vector.broadcast %cst_9 : f32 to vector<8x64xf32>
      %c0_10 = arith.constant 0 : index
      %c0_11 = arith.constant 0 : index
      %13 = vector.load %arg8[%c0_10, %c0_11] : memref<8x64xf32, #tpu.memory_space<vmem>>, vector<8x64xf32>
      tpu.vector_store %arg8[%c0_10, %c0_11], %12 {strides = array<i32>} : memref<8x64xf32, #tpu.memory_space<vmem>>, vector<8x64xf32>,
    } else {
    }
    %c0 = arith.constant 0 : index
    %c0_1 = arith.constant 0 : index
    %c0_2 = arith.constant 0 : index
    %3 = vector.load %arg2[%c0, %c0_1, %c0_2] : memref<8x3x64xbf16, #tpu.memory_space<vmem>>, vector<8x3x64xbf16>
    %4 = arith.extf %3 : vector<8x3x64xbf16> to vector<8x3x64xf32>
    %c0_3 = arith.constant 0 : index
    %c0_4 = arith.constant 0 : index
    %5 = vector.load %arg8[%c0_3, %c0_4] : memref<8x64xf32, #tpu.memory_space<vmem>>, vector<8x64xf32>
    %cst = arith.constant dense<0.000000e+00> : vector<8x64xf32>
    %6 = vector.multi_reduction <add>, %4, %cst [1] : vector<8x3x64xf32> to vector<8x64xf32>
    %7 = arith.addf %5, %6 : vector<8x64xf32>
    %c0_5 = arith.constant 0 : index
    %c0_6 = arith.constant 0 : index
    %8 = vector.load %arg8[%c0_5, %c0_6] : memref<8x64xf32, #tpu.memory_space<vmem>>, vector<8x64xf32>
    tpu.vector_store %arg8[%c0_5, %c0_6], %7 {strides = array<i32>} : memref<8x64xf32, #tpu.memory_space<vmem>>, vector<8x64xf32>,
    %c0_i32_7 = arith.constant 0 : i32
    %9 = arith.cmpi eq, %arg1, %c0_i32_7 : i32
    %10 = arith.extui %9 : i1 to i32
    %c0_i32_8 = arith.constant 0 : i32
    %11 = arith.cmpi ne, %10, %c0_i32_8 : i32
    scf.if %11 {
      %c0_9 = arith.constant 0 : index
      %c0_10 = arith.constant 0 : index
      %12 = vector.load %arg8[%c0_9, %c0_10] : memref<8x64xf32, #tpu.memory_space<vmem>>, vector<8x64xf32>
      %c0_11 = arith.constant 0 : index
      %c0_12 = arith.constant 0 : index
      %13 = vector.load %arg3[%c0_11, %c0_12] : memref<64x128xf32, #tpu.memory_space<vmem>>, vector<64x128xf32>
      %cst_13 = arith.constant dense<0.000000e+00> : vector<8x128xf32>
      %14 = tpu.matmul %12, %13, %cst_13 {dimension_numbers = #tpu.dot_dimension_numbers<[1], [0], [0], [1], [0, 0, 1, 1], [], []>} : vector<8x64xf32>, vector<64x128xf32>, vector<8x128xf32> -> vector<8x128xf32>
      %c0_14 = arith.constant 0 : index
      %c0_15 = arith.constant 0 : index
      %15 = vector.load %arg4[%c0_14, %c0_15] : memref<1x128xf32, #tpu.memory_space<vmem>>, vector<1x128xf32>
      %16 = vector.broadcast %15 : vector<1x128xf32> to vector<8x128xf32>
      %17 = arith.addf %14, %16 : vector<8x128xf32>
      %c0_16 = arith.constant 0 : index
      %c0_17 = arith.constant 0 : index
      %18 = vector.load %arg6[%c0_16, %c0_17] : memref<8x128xf32, #tpu.memory_space<vmem>>, vector<8x128xf32>
      tpu.vector_store %arg6[%c0_16, %c0_17], %17 {strides = array<i32>} : memref<8x128xf32, #tpu.memory_space<vmem>>, vector<8x128xf32>,
      %19 = tpu.iota {dimensions = array<i32: 1>} : vector<8x128xi32>
      %c2_i32 = arith.constant 2 : i32
      %20 = vector.broadcast %c2_i32 : i32 to vector<8x128xi32>
      %21 = arith.cmpi slt, %19, %20 : vector<8x128xi32>
      %cst_18 = arith.constant -1.000000e+30 : f32
      %22 = vector.broadcast %cst_18 : f32 to vector<8x128xf32>
      %23 = arith.select %21, %17, %22 : vector<8x128xi1>, vector<8x128xf32>
      %cst_19 = arith.constant dense<0xFF800000> : vector<8xf32>
      %24 = vector.multi_reduction <maximumf>, %23, %cst_19 [1] : vector<8x128xf32> to vector<8xf32>
      %25 = vector.shape_cast %24 : vector<8xf32> to vector<8x1xf32>
      %26 = vector.broadcast %25 : vector<8x1xf32> to vector<8x128xf32>
      %27 = arith.subf %23, %26 : vector<8x128xf32>
      %28 = math.exp %27 : vector<8x128xf32>
      %cst_20 = arith.constant dense<0.000000e+00> : vector<8xf32>
      %29 = vector.multi_reduction <add>, %28, %cst_20 [1] : vector<8x128xf32> to vector<8xf32>
      %30 = vector.shape_cast %29 : vector<8xf32> to vector<8x1xf32>
      %31 = math.log %30 : vector<8x1xf32>
      %32 = arith.addf %25, %31 : vector<8x1xf32>
      %c0_21 = arith.constant 0 : index
      %c0_22 = arith.constant 0 : index
      %33 = vector.load %arg5[%c0_21, %c0_22] : memref<8x1xi32, #tpu.memory_space<vmem>>, vector<8x1xi32>
      %34 = vector.broadcast %33 : vector<8x1xi32> to vector<8x128xi32>
      %35 = arith.cmpi eq, %19, %34 : vector<8x128xi32>
      %36 = arith.extui %35 : vector<8x128xi1> to vector<8x128xi32>
      %37 = arith.sitofp %36 : vector<8x128xi32> to vector<8x128xf32>
      %38 = arith.mulf %23, %37 : vector<8x128xf32>
      %cst_23 = arith.constant dense<0.000000e+00> : vector<8xf32>
      %39 = vector.multi_reduction <add>, %38, %cst_23 [1] : vector<8x128xf32> to vector<8xf32>
      %40 = vector.shape_cast %39 : vector<8xf32> to vector<8x1xf32>
      %41 = arith.subf %32, %40 : vector<8x1xf32>
      %c0_24 = arith.constant 0 : index
      %c0_25 = arith.constant 0 : index
      %42 = vector.load %arg7[%c0_24, %c0_25] : memref<8x1xf32, #tpu.memory_space<vmem>>, vector<8x1xf32>
      tpu.vector_store %arg7[%c0_24, %c0_25], %41 {strides = array<i32>} : memref<8x1xf32, #tpu.memory_space<vmem>>, vector<8x1xf32>,
    } else {
    }
    return
  }
  func.func @transform_0(%arg0: i32, %arg1: i32) -> (i32, i32, i32) {
    %c0_i32 = arith.constant 0 : i32
    %c0_i32_0 = arith.constant 0 : i32
    return %arg0, %arg1, %c0_i32 : i32, i32, i32
  }
  func.func @transform_1(%arg0: i32, %arg1: i32) -> (i32, i32) {
    %c0_i32 = arith.constant 0 : i32
    %c0_i32_0 = arith.constant 0 : i32
    %c0_i32_1 = arith.constant 0 : i32
    return %c0_i32, %c0_i32_0 : i32, i32
  }
  func.func @transform_2(%arg0: i32, %arg1: i32) -> (i32, i32) {
    %c0_i32 = arith.constant 0 : i32
    %c0_i32_0 = arith.constant 0 : i32
    %c0_i32_1 = arith.constant 0 : i32
    return %c0_i32, %c0_i32_0 : i32, i32
  }
  func.func @transform_3(%arg0: i32, %arg1: i32) -> (i32, i32) {
    %c0_i32 = arith.constant 0 : i32
    %c0_i32_0 = arith.constant 0 : i32
    return %arg0, %c0_i32 : i32, i32
  }
  func.func @transform_4(%arg0: i32, %arg1: i32) -> (i32, i32) {
    %c0_i32 = arith.constant 0 : i32
    %c0_i32_0 = arith.constant 0 : i32
    return %arg0, %c0_i32 : i32, i32
  }
  func.func @transform_5(%arg0: i32, %arg1: i32) -> (i32, i32) {
    %c0_i32 = arith.constant 0 : i32
    %c0_i32_0 = arith.constant 0 : i32
    return %arg0, %c0_i32 : i32, i32
  }
}

</mosaic_0001>

<llo_original>
// kernel: tpu_custom_call.1
$region0: #{tpu_custom_call.1}
  #allocation0 [shape = 'u32[]', space=smem, size = 0x4, offset = 0x4, fixed_abs, tag = 'smem constant byte address 0x4 - core index']
  #allocation1 [shape = 'u32[72,128]{1,0:T(1,128)}', space=vmem, size = 0x9000, scoped, tag = 'internal scratch']
  #allocation2 [shape = 'f32[8,64]{1,0:T(8,128)}', space=vmem, size = 0x1000, scoped, tag = 'scratch operand']
  %s0 = inlined_call_operand.vmem [shape: bf16[8,3,64], index: 0, kind: input, shape index: {}]
  %s1 = inlined_call_operand.hbm [shape: f32[64,128], index: 1, kind: input, shape index: {}]
  %s2 = inlined_call_operand.vmem [shape: f32[1,128], index: 2, kind: input, shape index: {}]
  %s3 = inlined_call_operand.vmem [shape: s32[8,1], index: 3, kind: input, shape index: {}]
  %s4 = inlined_call_operand.hbm [shape: f32[8,128], index: 4, kind: output, shape index: {0}]
  %s5 = inlined_call_operand.vmem [shape: f32[8,1], index: 5, kind: output, shape index: {1}]
  %6 = xla_tuple %s4, %s5
  %s7 = sld [smem:[#allocation0]]
  $region46: #{tpu_custom_call.1} parent=0
    _
  %s9 = ssub.s32 1, %s7
  %s10 = scalar_select 0, %s9, %s7
  $region1: #{tpu_custom_call.1} parent=0
    #allocation3 [shape = 'u8[32768]{0}', space=vmem, size = 0x8000, scoped, tag = 'input window, operand 1, single buffered']
    #allocation4 [shape = 's32[1]{0}', space=sflag, size = 0x4, scoped, tag = 'scoped memory for tpu_custom_call.1']
    #allocation5 [shape = 's32[1]{0}', space=sflag, size = 0x4, scoped, tag = 'scoped memory for tpu_custom_call.1']
    #allocation6 [shape = 'u8[4096]{0}', space=vmem, size = 0x1000, scoped, tag = 'output window, operand 0, single buffered']
    %11 = vsyncpa [#allocation4], 0
    %12 = vsyncpa [#allocation5], 0
    // Predicated region
    $region2: #{tpu_custom_call.1} parent=1 // pred_check
      _
    $region3: #{tpu_custom_call.1} parent=1 // pred_check_branch
      %14 = sbr.rel (0) target = $region5
    $region4: #{tpu_custom_call.1} parent=1 // pred_region
      _
    $region5: #{tpu_custom_call.1} parent=1 // pred_fallthru
      _
    // Predicated region
    $region6: #{tpu_custom_call.1} parent=1 // pred_check
      _
    $region7: #{tpu_custom_call.1} parent=1 // pred_check_branch
      %16 = sbr.rel (0) target = $region9
    $region8: #{tpu_custom_call.1} parent=1 // pred_region
      %18 = vsyncadd [#allocation4], 0
      %s19 = sshll.u32 %s1, 4
      %s20 = int_to_ptr.hbm [resolvable:$true] %s19
      %s21 = sshll.u32 [#allocation3], 4
      %s22 = int_to_ptr.vmem [resolvable:$true] %s21
      %27 = dma.hbm_to_vmem [thread:$0]  %s20, 1024, %s22, [#allocation4], 128, 128, 8
    $region9: #{tpu_custom_call.1} parent=1 // pred_fallthru
      _
    // Predicated region
    $region10: #{tpu_custom_call.1} parent=1 // pred_check
      _
    $region11: #{tpu_custom_call.1} parent=1 // pred_check_branch
      %29 = sbr.rel (0) target = $region13
    $region12: #{tpu_custom_call.1} parent=1 // pred_region
      _
    $region13: #{tpu_custom_call.1} parent=1 // pred_fallthru
      _
    // Predicated region
    $region14: #{tpu_custom_call.1} parent=1 // pred_check
      _
    $region15: #{tpu_custom_call.1} parent=1 // pred_check_branch
      %31 = sbr.rel (0) target = $region17
    $region16: #{tpu_custom_call.1} parent=1 // pred_region
      _
    $region17: #{tpu_custom_call.1} parent=1 // pred_fallthru
      _
    // Predicated region
    $region18: #{tpu_custom_call.1} parent=1 // pred_check
      _
    $region19: #{tpu_custom_call.1} parent=1 // pred_check_branch
      %33 = sbr.rel (0) target = $region21
    $region20: #{tpu_custom_call.1} parent=1 // pred_region
      %35 = dma.done [#allocation4], 1024
    $region21: #{tpu_custom_call.1} parent=1 // pred_fallthru
      _
    %p36 = scmp.eq.s32.totalorder 0, 0
    // Predicated region
    $region22: #{tpu_custom_call.1} parent=1 // pred_check
      %p37 = pneg %p36
    $region23: #{tpu_custom_call.1} parent=1 // pred_check_branch
      %39 = sbr.rel (%p37) target = $region25
    $region24: #{tpu_custom_call.1} parent=1 // pred_region
      %vm40 = vcmask 523264
      %41 = vst.msk [vmem:[#allocation2] sm:$0xff] %vm40, 0.0
    $region25: #{tpu_custom_call.1} parent=1 // pred_fallthru
      _
    %v42 = vld [vmem:[%s0] sm:$0x3]
    %v43 = vld [vmem:[%s0 + $0x2] sm:$0x3]
    %v44 = vld [vmem:[%s0 + $0x4] sm:$0x3]
    %v45 = vld [vmem:[%s0 + $0x6] sm:$0x3]
    %v46 = vld [vmem:[%s0 + $0x8] sm:$0x3]
    %v47 = vld [vmem:[%s0 + $0xa] sm:$0x3]
    %v48 = vld [vmem:[%s0 + $0xc] sm:$0x3]
    %v49 = vld [vmem:[%s0 + $0xe] sm:$0x3]
    %v50 = vunpack.c.l.bf16 %v42
    %v51 = vunpack.c.l.bf16 %v43
    %v52 = vunpack.c.l.bf16 %v44
    %v53 = vunpack.c.l.bf16 %v45
    %v54 = vunpack.c.l.bf16 %v46
    %v55 = vunpack.c.l.bf16 %v47
    %v56 = vunpack.c.l.bf16 %v48
    %v57 = vunpack.c.l.bf16 %v49
    %v58 = vld [vmem:[#allocation2] sm:$0xff]
    %vm59 = vcmask 518144
    %v60 = vsel %vm59, %v50, 0.0
    %v61 = vrot.slane %v60, 4
    %v62 = vadd.f32 %v60, %v61
    %v63 = vrot.slane %v62, 2
    %v64 = vadd.f32 %v62, %v63
    %v65 = vrot.slane %v64, 1
    %v66 = vadd.f32 %v64, %v65
    %v67 = vsel %vm59, %v51, 0.0
    %v68 = vrot.slane %v67, 4
    %v69 = vadd.f32 %v67, %v68
    %v70 = vrot.slane %v69, 2
    %v71 = vadd.f32 %v69, %v70
    %v72 = vrot.slane %v71, 1
    %v73 = vadd.f32 %v71, %v72
    %v74 = vsel %vm59, %v52, 0.0
    %v75 = vrot.slane %v74, 4
    %v76 = vadd.f32 %v74, %v75
    %v77 = vrot.slane %v76, 2
    %v78 = vadd.f32 %v76, %v77
    %v79 = vrot.slane %v78, 1
    %v80 = vadd.f32 %v78, %v79
    %v81 = vsel %vm59, %v53, 0.0
    %v82 = vrot.slane %v81, 4
    %v83 = vadd.f32 %v81, %v82
    %v84 = vrot.slane %v83, 2
    %v85 = vadd.f32 %v83, %v84
    %v86 = vrot.slane %v85, 1
    %v87 = vadd.f32 %v85, %v86
    %v88 = vsel %vm59, %v54, 0.0
    %v89 = vrot.slane %v88, 4
    %v90 = vadd.f32 %v88, %v89
    %v91 = vrot.slane %v90, 2
    %v92 = vadd.f32 %v90, %v91
    %v93 = vrot.slane %v92, 1
    %v94 = vadd.f32 %v92, %v93
    %v95 = vsel %vm59, %v55, 0.0
    %v96 = vrot.slane %v95, 4
    %v97 = vadd.f32 %v95, %v96
    %v98 = vrot.slane %v97, 2
    %v99 = vadd.f32 %v97, %v98
    %v100 = vrot.slane %v99, 1
    %v101 = vadd.f32 %v99, %v100
    %v102 = vsel %vm59, %v56, 0.0
    %v103 = vrot.slane %v102, 4
    %v104 = vadd.f32 %v102, %v103
    %v105 = vrot.slane %v104, 2
    %v106 = vadd.f32 %v104, %v105
    %v107 = vrot.slane %v106, 1
    %v108 = vadd.f32 %v106, %v107
    %v109 = vsel %vm59, %v57, 0.0
    %v110 = vrot.slane %v109, 4
    %v111 = vadd.f32 %v109, %v110
    %v112 = vrot.slane %v111, 2
    %v113 = vadd.f32 %v111, %v112
    %v114 = vrot.slane %v113, 1
    %v115 = vadd.f32 %v113, %v114
    %vm124 = vcmask 1041409
    %v125 = vsel %vm124, %v73, %v66
    %vm126 = vcmask 1042434
    %v127 = vsel %vm126, %v80, %v125
    %vm128 = vcmask 1043459
    %v129 = vsel %vm128, %v87, %v127
    %vm130 = vcmask 1044484
    %v131 = vsel %vm130, %v94, %v129
    %vm132 = vcmask 1045509
    %v133 = vsel %vm132, %v101, %v131
    %vm134 = vcmask 1046534
    %v135 = vsel %vm134, %v108, %v133
    %vm136 = vcmask 1047559
    %v137 = vsel %vm136, %v115, %v135
    %v139 = vadd.f32 %v58, %v137
    %vm140 = vcmask 523264
    %141 = vst.msk [vmem:[#allocation2] sm:$0xff] %vm140, %v139
    // Predicated region
    $region26: #{tpu_custom_call.1} parent=1 // pred_check
      %p142 = pneg %p36
    $region27: #{tpu_custom_call.1} parent=1 // pred_check_branch
      %144 = sbr.rel (%p142) target = $region29
    $region28: #{tpu_custom_call.1} parent=1 // pred_region
      %v145 = vld [vmem:[#allocation2] sm:$0xff]
      %v146 = vld [vmem:[#allocation3] sm:$0xff]
      %v147 = vld [vmem:[#allocation3 + $0x8] sm:$0xff]
      %v148 = vld [vmem:[#allocation3 + $0x10] sm:$0xff]
      %v149 = vld [vmem:[#allocation3 + $0x18] sm:$0xff]
      %v150 = vld [vmem:[#allocation3 + $0x20] sm:$0xff]
      %v151 = vld [vmem:[#allocation3 + $0x28] sm:$0xff]
      %v152 = vld [vmem:[#allocation3 + $0x30] sm:$0xff]
      %v153 = vld [vmem:[#allocation3 + $0x38] sm:$0xff]
      %v154 = vld [vmem:[%s2] sm:$0x1]
      %v156 = vperm.slane %v154, 0
      %v159 = vsel %vm140, %v145, 0
      %161 = vmatpush.msra.mxu0 0.0
      %162 = vmatpush.msra.mxu0 0.0
      %163 = vmatpush.msra.mxu0 0.0
      %164 = vmatpush.msra.mxu0 0.0
      %165 = vmatpush.msra.mxu0 0.0
      %166 = vmatpush.msra.mxu0 0.0
      %167 = vmatpush.msra.mxu0 0.0
      %168 = vmatpush.msra.mxu0 0.0
      %169 = vmatpush.msra.mxu0 %v153
      %170 = vmatpush.msra.mxu0 %v152
      %171 = vmatpush.msra.mxu0 %v151
      %172 = vmatpush.msra.mxu0 %v150
      %173 = vmatpush.msra.mxu0 %v149
      %174 = vmatpush.msra.mxu0 %v148
      %175 = vmatpush.msra.mxu0 %v147
      %176 = vmatpush.msra.mxu0 %v146
      %177 = vmatmul.f32.gmra.mxu0 %v159
      %v178 = vpop.f32.mrf.mxu0
      %v179 = vadd.f32 %v156, %v178
      %180 = vdwg.mxu0
      %181 = vst [vmem:[#allocation6] sm:$0xff] %v179
      %v182 = vlaneseq
      %v183 = vand.u32 %v182, 127
      %vm184 = vcmp.lt.s32.totalorder %v183, 2
      %v185 = vsel %vm184, %v179, -1e+30
      %186 = vmax.xlane.f32.xlu0 %v185
      %v187 = vpop.xlane.xlu0 %186
      %v188 = vsub.f32 %v185, %v187
      %v189 = vmul.f32 %v188, 1.442695
      %v190 = vpow.pop %v189
      %191 = vadd.xlane.f32.xlu0 %v190
      %v192 = vpop.xlane.xlu0 %191
      %v193 = vlog2.pop %v192
      %v194 = vmul.f32 %v193, 0.6931472
      %v195 = vadd.f32 %v187, %v194
      %v196 = vld [vmem:[%s3] sm:$0xff]
      %197 = vset.pattern.permute.xlu0 0
      %198 = vperm.xlu0 %197, %v196
      %v199 = vpop.permute.xlu0 %198
      %vm200 = vcmp.eq.s32.totalorder %v183, %v199
      %v201 = vsel %vm200, 1, 0
      %v202 = vcvt.s32.f32 %v201
      %v203 = vmul.f32 %v185, %v202
      %204 = vadd.xlane.f32.xlu0 %v203
      %v205 = vpop.xlane.xlu0 %204
      %v206 = vsub.f32 %v195, %v205
      %vm207 = vcmask 7168
      %208 = vst.msk [vmem:[%s5] sm:$0xff] %vm207, %v206
    $region29: #{tpu_custom_call.1} parent=1 // pred_fallthru
      _
    // Predicated region
    $region30: #{tpu_custom_call.1} parent=1 // pred_check
      _
    $region31: #{tpu_custom_call.1} parent=1 // pred_check_branch
      %210 = sbr.rel (0) target = $region33
    $region32: #{tpu_custom_call.1} parent=1 // pred_region
      %212 = vsyncadd [#allocation5], 0
      %s214 = sshll.u32 [#allocation6], 4
      %s215 = int_to_ptr.vmem [resolvable:$true] %s214
      %s216 = sshll.u32 %s4, 4
      %s217 = int_to_ptr.hbm [resolvable:$true] %s216
      %219 = dma.vmem_to_hbm [thread:$0]  %s215, 128, %s217, [#allocation5]
    $region33: #{tpu_custom_call.1} parent=1 // pred_fallthru
      _
    // Predicated region
    $region34: #{tpu_custom_call.1} parent=1 // pred_check
      _
    $region35: #{tpu_custom_call.1} parent=1 // pred_check_branch
      %221 = sbr.rel (0) target = $region37
    $region36: #{tpu_custom_call.1} parent=1 // pred_region
      _
    $region37: #{tpu_custom_call.1} parent=1 // pred_fallthru
      _
    // Predicated region
    $region38: #{tpu_custom_call.1} parent=1 // pred_check
      _
    $region39: #{tpu_custom_call.1} parent=1 // pred_check_branch
      %223 = sbr.rel (0) target = $region41
    $region40: #{tpu_custom_call.1} parent=1 // pred_region
      %225 = dma.done [#allocation5], 128
    $region41: #{tpu_custom_call.1} parent=1 // pred_fallthru
      _
    // Predicated region
    $region42: #{tpu_custom_call.1} parent=1 // pred_check
      _
    $region43: #{tpu_custom_call.1} parent=1 // pred_check_branch
      %227 = sbr.rel (0) target = $region45
    $region44: #{tpu_custom_call.1} parent=1 // pred_region
      _
    $region45: #{tpu_custom_call.1} parent=1 // pred_fallthru
      _
    %228 = vsyncpa [#allocation4], 1
    %229 = vsyncpa [#allocation5], 1

</llo_original>
